<compile_context>
chip_gen: v7x
topology: tpu7x:2x2x1
jax: 0.10.0
libtpu: 0.0.40
codegen_flags: <defaults>
</compile_context>

<pallas_src>
import jax
import jax.numpy as jnp
import numpy as np
from jax.experimental import pallas as pl

# ---- configs (small, consistent with the module) ----
B = 2            # batch
C = 4            # enc_in / channels
SEQ_LEN = 16     # seq_len
PATCH_SIZE = 4   # patch_size
NUM_PATCHES = SEQ_LEN // PATCH_SIZE          # ceil(16/4)=4 -> remaining_timesteps = 0
L = NUM_PATCHES * PATCH_SIZE                 # flattened (padded) time axis = 16
PRED_LEN = 8
NUM_BLOCKS = 2
REVIN_EPS = 1e-5
BN_EPS = 1e-5
R = B * C                                    # stacked (batch, channel) rows = 8

HIGH = jax.lax.Precision.HIGHEST             # used only by the pure-JAX reference


def _patchconv_kernel(x_ref,
                      wch_ref, bch_ref, sc_c_ref, sh_c_ref,
                      kip_ref, bip_ref, sc_s_ref, sh_s_ref,
                      wlin_ref, blin_ref,
                      o_ref):
    x = x_ref[...]                                           # (R, L) = (B*C, L)

    # --- RevIN 'norm' (affine=False): stats over time per (batch, channel) row ---
    mean = jnp.mean(x, axis=1, keepdims=True)                # (R, 1)
    var = jnp.mean((x - mean) ** 2, axis=1, keepdims=True)   # population variance
    stdev = jnp.sqrt(var + REVIN_EPS)
    h = (x - mean) / stdev

    # TODO(synk): replication-pad path (seq_len % patch_size != 0) not exercised here.

    wch = wch_ref[...]      # (R, R)  kron(I_B, Wch): block-diagonal channel mix
    bch = bch_ref[...]      # (R, 1)
    sc_c = sc_c_ref[...]    # (R, 1)  folded channel-BatchNorm scale
    sh_c = sh_c_ref[...]    # (R, 1)  folded channel-BatchNorm shift
    kip = kip_ref[...]      # (L, L)  kron(I_P, Wip.T): block-diagonal intra-patch mix
    bip = bip_ref[...]      # (1, L)
    sc_s = sc_s_ref[...]    # (1, L)  folded patch-position-BatchNorm scale
    sh_s = sh_s_ref[...]    # (1, L)

    for _ in range(NUM_BLOCKS):
        # ---- ConvChannelMixer: folded BN + 1x1 conv over channels + ReLU + residual ----
        xn = h * sc_c + sh_c
        y = jnp.dot(wch, xn, preferred_element_type=jnp.float32) + bch
        h = xn + jnp.maximum(y, 0.0)                         # Dropout = identity (eval)

        # ---- ConvIntraPatchMixer applied twice (shared weights; see MixerBlock) ----
        for _ in range(2):
            xn = h * sc_s + sh_s
            y = jnp.dot(xn, kip, preferred_element_type=jnp.float32) + bip
            h = xn + jnp.maximum(y, 0.0)

    # ---- output Linear over the flattened time axis ----
    out = jnp.dot(h, wlin_ref[...], preferred_element_type=jnp.float32) + blin_ref[...]

    # ---- RevIN 'denorm' ----
    o_ref[...] = out * stdev + mean


def pack_params(params):
    """One-time host-side packing: fold eval-mode BatchNorm into scale/shift,
    build block-diagonal mixing matrices, lay everything out for the kernel."""
    f32 = jnp.float32
    inv_c = 1.0 / jnp.sqrt(params["rv_c"] + BN_EPS)
    sc_c = params["g_c"] * inv_c                              # (C,)
    sh_c = params["b_c"] - params["rm_c"] * sc_c
    inv_s = 1.0 / jnp.sqrt(params["rv_s"] + BN_EPS)
    sc_s = params["g_s"] * inv_s                              # (PATCH_SIZE,)
    sh_s = params["b_s"] - params["rm_s"] * sc_s

    return dict(
        # channel mix for the batch-stacked layout: block-diagonal (R, R)
        Wch_big=jnp.kron(jnp.eye(B, dtype=f32), params["Wch"]),
        bch=jnp.tile(params["bch"], B).reshape(R, 1),
        sc_c=jnp.tile(sc_c, B).reshape(R, 1),
        sh_c=jnp.tile(sh_c, B).reshape(R, 1),
        # intra-patch mix acting on the flattened time axis (l = p*S + s).
        # TODO(synk): for large L, restructure as a (R*P, S) @ Wip.T matmul
        # instead of materializing this O(L^2) block-diagonal operand.
        Kip=jnp.kron(jnp.eye(NUM_PATCHES, dtype=f32), params["Wip"].T),   # (L, L)
        bip=jnp.tile(params["bip"], NUM_PATCHES).reshape(1, L),
        sc_s=jnp.tile(sc_s, NUM_PATCHES).reshape(1, L),
        sh_s=jnp.tile(sh_s, NUM_PATCHES).reshape(1, L),
        # output Linear(seq_len -> pred_len)
        WlinT=params["Wlin"].T,                                           # (L, PRED_LEN)
        blin=params["blin"].reshape(1, PRED_LEN),
    )


def patchconv_forward(x, packed):
    """x: [B, T, C] float32 -> y: [B, pred_len, C] float32 (single kernel call)."""
    x_rows = jnp.swapaxes(x, 1, 2).reshape(R, L)      # [B,C,T] stacked -> (B*C, L)

    y_rows = pl.pallas_call(
        _patchconv_kernel,
        out_shape=jax.ShapeDtypeStruct((R, PRED_LEN), jnp.float32),
    )(x_rows,
      packed["Wch_big"], packed["bch"], packed["sc_c"], packed["sh_c"],
      packed["Kip"], packed["bip"], packed["sc_s"], packed["sh_s"],
      packed["WlinT"], packed["blin"])

    return jnp.swapaxes(y_rows.reshape(B, C, PRED_LEN), 1, 2)   # [B, pred_len, C]


def reference_forward(x, p):
    """Pure-JAX reference that mirrors the PyTorch forward literally (eval mode)."""
    mean = x.mean(axis=1, keepdims=True)
    var = ((x - mean) ** 2).mean(axis=1, keepdims=True)
    std = jnp.sqrt(var + REVIN_EPS)
    h = (x - mean) / std
    h = jnp.swapaxes(h, 1, 2)                                         # [B, C, T]
    h = h.reshape(B, C, NUM_PATCHES, PATCH_SIZE)
    for _ in range(NUM_BLOCKS):
        # ConvChannelMixer
        xn = ((h - p["rm_c"][None, :, None, None])
              / jnp.sqrt(p["rv_c"] + BN_EPS)[None, :, None, None]
              * p["g_c"][None, :, None, None] + p["b_c"][None, :, None, None])
        y = jnp.einsum("oc,bcps->bops", p["Wch"], xn, precision=HIGH) \
            + p["bch"][None, :, None, None]
        h = xn + jax.nn.relu(y)
        # ConvIntraPatchMixer applied twice
        for _ in range(2):
            hs = jnp.swapaxes(h, 1, 3)                                # [B, S, P, C]
            xn = ((hs - p["rm_s"][None, :, None, None])
                  / jnp.sqrt(p["rv_s"] + BN_EPS)[None, :, None, None]
                  * p["g_s"][None, :, None, None] + p["b_s"][None, :, None, None])
            y = jnp.einsum("ts,bspc->btpc", p["Wip"], xn, precision=HIGH) \
                + p["bip"][None, :, None, None]
            y = jax.nn.relu(y)
            h = jnp.swapaxes(xn, 1, 3) + jnp.swapaxes(y, 1, 3)
    h = h.reshape(B, C, L)
    y = jnp.einsum("bcl,pl->bcp", h, p["Wlin"], precision=HIGH) + p["blin"]
    y = jnp.swapaxes(y, 1, 2)                                         # [B, pred_len, C]
    return y * std + mean


if __name__ == "__main__":
    key = jax.random.PRNGKey(0)
    ks = jax.random.split(key, 20)
    f32 = jnp.float32

    x = jax.random.normal(ks[0], (B, SEQ_LEN, C), f32)

    params = {
        # ConvChannelMixer (eval-mode BatchNorm2d running stats + 1x1 Conv2d)
        "Wch": 0.3 * jax.random.normal(ks[1], (C, C), f32),
        "bch": 0.1 * jax.random.normal(ks[2], (C,), f32),
        "g_c": 1.0 + 0.1 * jax.random.normal(ks[3], (C,), f32),
        "b_c": 0.1 * jax.random.normal(ks[4], (C,), f32),
        "rm_c": 0.1 * jax.random.normal(ks[5], (C,), f32),
        "rv_c": 0.9 + 0.2 * jax.random.uniform(ks[6], (C,), f32),
        # ConvIntraPatchMixer (also used in place of the inter-patch mixer)
        "Wip": 0.3 * jax.random.normal(ks[7], (PATCH_SIZE, PATCH_SIZE), f32),
        "bip": 0.1 * jax.random.normal(ks[8], (PATCH_SIZE,), f32),
        "g_s": 1.0 + 0.1 * jax.random.normal(ks[9], (PATCH_SIZE,), f32),
        "b_s": 0.1 * jax.random.normal(ks[10], (PATCH_SIZE,), f32),
        "rm_s": 0.1 * jax.random.normal(ks[11], (PATCH_SIZE,), f32),
        "rv_s": 0.9 + 0.2 * jax.random.uniform(ks[12], (PATCH_SIZE,), f32),
        # output Linear(seq_len -> pred_len)
        "Wlin": 0.3 * jax.random.normal(ks[13], (PRED_LEN, L), f32),
        "blin": 0.1 * jax.random.normal(ks[14], (PRED_LEN,), f32),
    }

    packed = pack_params(params)                 # one-time packing, outside the jit
    fwd = jax.jit(patchconv_forward)

    y = fwd(x, packed)
    y = jax.block_until_ready(y)

    y_ref = reference_forward(x, params)
    np.testing.assert_allclose(np.asarray(y), np.asarray(y_ref), rtol=2e-2, atol=2e-2)
    assert y.shape == (B, PRED_LEN, C)

    print("KERNEL_OK")
</pallas_src>

<mosaic_0001>
module attributes {stable_mosaic.version = 11 : i64} {
  func.func @_patchconv_kernel(%arg0: memref<8x16xf32, #tpu.memory_space<vmem>>, %arg1: memref<8x8xf32, #tpu.memory_space<vmem>>, %arg2: memref<8x1xf32, #tpu.memory_space<vmem>>, %arg3: memref<8x1xf32, #tpu.memory_space<vmem>>, %arg4: memref<8x1xf32, #tpu.memory_space<vmem>>, %arg5: memref<16x16xf32, #tpu.memory_space<vmem>>, %arg6: memref<1x16xf32, #tpu.memory_space<vmem>>, %arg7: memref<1x16xf32, #tpu.memory_space<vmem>>, %arg8: memref<1x16xf32, #tpu.memory_space<vmem>>, %arg9: memref<16x8xf32, #tpu.memory_space<vmem>>, %arg10: memref<1x8xf32, #tpu.memory_space<vmem>>, %arg11: memref<8x8xf32, #tpu.memory_space<vmem>>) attributes {dimension_semantics = [], scalar_prefetch = 0 : i64, scratch_operands = 0 : i64, tpu.core_type = #tpu.core_type<tc>} {
    %c0 = arith.constant 0 : index
    %c0_0 = arith.constant 0 : index
    %0 = vector.load %arg0[%c0, %c0_0] : memref<8x16xf32, #tpu.memory_space<vmem>>, vector<8x16xf32>
    %cst = arith.constant dense<0.000000e+00> : vector<8xf32>
    %1 = vector.multi_reduction <add>, %0, %cst [1] : vector<8x16xf32> to vector<8xf32>
    %2 = vector.shape_cast %1 : vector<8xf32> to vector<8x1xf32>
    %cst_1 = arith.constant 1.600000e+01 : f32
    %3 = vector.broadcast %cst_1 : f32 to vector<8x1xf32>
    %4 = arith.divf %2, %3 : vector<8x1xf32>
    %5 = vector.broadcast %4 : vector<8x1xf32> to vector<8x16xf32>
    %6 = arith.subf %0, %5 : vector<8x16xf32>
    %7 = arith.mulf %6, %6 : vector<8x16xf32>
    %cst_2 = arith.constant dense<0.000000e+00> : vector<8xf32>
    %8 = vector.multi_reduction <add>, %7, %cst_2 [1] : vector<8x16xf32> to vector<8xf32>
    %9 = vector.shape_cast %8 : vector<8xf32> to vector<8x1xf32>
    %cst_3 = arith.constant 1.600000e+01 : f32
    %10 = vector.broadcast %cst_3 : f32 to vector<8x1xf32>
    %11 = arith.divf %9, %10 : vector<8x1xf32>
    %cst_4 = arith.constant 9.99999974E-6 : f32
    %12 = vector.broadcast %cst_4 : f32 to vector<8x1xf32>
    %13 = arith.addf %11, %12 : vector<8x1xf32>
    %14 = math.sqrt %13 : vector<8x1xf32>
    %15 = vector.broadcast %4 : vector<8x1xf32> to vector<8x16xf32>
    %16 = arith.subf %0, %15 : vector<8x16xf32>
    %17 = vector.broadcast %14 : vector<8x1xf32> to vector<8x16xf32>
    %18 = arith.divf %16, %17 : vector<8x16xf32>
    %c0_5 = arith.constant 0 : index
    %c0_6 = arith.constant 0 : index
    %19 = vector.load %arg1[%c0_5, %c0_6] : memref<8x8xf32, #tpu.memory_space<vmem>>, vector<8x8xf32>
    %c0_7 = arith.constant 0 : index
    %c0_8 = arith.constant 0 : index
    %20 = vector.load %arg2[%c0_7, %c0_8] : memref<8x1xf32, #tpu.memory_space<vmem>>, vector<8x1xf32>
    %c0_9 = arith.constant 0 : index
    %c0_10 = arith.constant 0 : index
    %21 = vector.load %arg3[%c0_9, %c0_10] : memref<8x1xf32, #tpu.memory_space<vmem>>, vector<8x1xf32>
    %c0_11 = arith.constant 0 : index
    %c0_12 = arith.constant 0 : index
    %22 = vector.load %arg4[%c0_11, %c0_12] : memref<8x1xf32, #tpu.memory_space<vmem>>, vector<8x1xf32>
    %c0_13 = arith.constant 0 : index
    %c0_14 = arith.constant 0 : index
    %23 = vector.load %arg5[%c0_13, %c0_14] : memref<16x16xf32, #tpu.memory_space<vmem>>, vector<16x16xf32>
    %c0_15 = arith.constant 0 : index
    %c0_16 = arith.constant 0 : index
    %24 = vector.load %arg6[%c0_15, %c0_16] : memref<1x16xf32, #tpu.memory_space<vmem>>, vector<1x16xf32>
    %c0_17 = arith.constant 0 : index
    %c0_18 = arith.constant 0 : index
    %25 = vector.load %arg7[%c0_17, %c0_18] : memref<1x16xf32, #tpu.memory_space<vmem>>, vector<1x16xf32>
    %c0_19 = arith.constant 0 : index
    %c0_20 = arith.constant 0 : index
    %26 = vector.load %arg8[%c0_19, %c0_20] : memref<1x16xf32, #tpu.memory_space<vmem>>, vector<1x16xf32>
    %27 = vector.broadcast %21 : vector<8x1xf32> to vector<8x16xf32>
    %28 = arith.mulf %18, %27 : vector<8x16xf32>
    %29 = vector.broadcast %22 : vector<8x1xf32> to vector<8x16xf32>
    %30 = arith.addf %28, %29 : vector<8x16xf32>
    %cst_21 = arith.constant dense<0.000000e+00> : vector<8x16xf32>
    %31 = tpu.matmul %19, %30, %cst_21 {dimension_numbers = #tpu.dot_dimension_numbers<[1], [0], [0], [1], [0, 0, 1, 1], [], []>} : vector<8x8xf32>, vector<8x16xf32>, vector<8x16xf32> -> vector<8x16xf32>
    %32 = vector.broadcast %20 : vector<8x1xf32> to vector<8x16xf32>
    %33 = arith.addf %31, %32 : vector<8x16xf32>
    %cst_22 = arith.constant 0.000000e+00 : f32
    %34 = vector.broadcast %cst_22 : f32 to vector<8x16xf32>
    %35 = arith.maximumf %33, %34 : vector<8x16xf32>
    %36 = arith.addf %30, %35 : vector<8x16xf32>
    %37 = vector.broadcast %25 : vector<1x16xf32> to vector<8x16xf32>
    %38 = arith.mulf %36, %37 : vector<8x16xf32>
    %39 = vector.broadcast %26 : vector<1x16xf32> to vector<8x16xf32>
    %40 = arith.addf %38, %39 : vector<8x16xf32>
    %cst_23 = arith.constant dense<0.000000e+00> : vector<8x16xf32>
    %41 = tpu.matmul %40, %23, %cst_23 {dimension_numbers = #tpu.dot_dimension_numbers<[1], [0], [0], [1], [0, 0, 1, 1], [], []>} : vector<8x16xf32>, vector<16x16xf32>, vector<8x16xf32> -> vector<8x16xf32>
    %42 = vector.broadcast %24 : vector<1x16xf32> to vector<8x16xf32>
    %43 = arith.addf %41, %42 : vector<8x16xf32>
    %cst_24 = arith.constant 0.000000e+00 : f32
    %44 = vector.broadcast %cst_24 : f32 to vector<8x16xf32>
    %45 = arith.maximumf %43, %44 : vector<8x16xf32>
    %46 = arith.addf %40, %45 : vector<8x16xf32>
    %47 = vector.broadcast %25 : vector<1x16xf32> to vector<8x16xf32>
    %48 = arith.mulf %46, %47 : vector<8x16xf32>
    %49 = vector.broadcast %26 : vector<1x16xf32> to vector<8x16xf32>
    %50 = arith.addf %48, %49 : vector<8x16xf32>
    %cst_25 = arith.constant dense<0.000000e+00> : vector<8x16xf32>
    %51 = tpu.matmul %50, %23, %cst_25 {dimension_numbers = #tpu.dot_dimension_numbers<[1], [0], [0], [1], [0, 0, 1, 1], [], []>} : vector<8x16xf32>, vector<16x16xf32>, vector<8x16xf32> -> vector<8x16xf32>
    %52 = vector.broadcast %24 : vector<1x16xf32> to vector<8x16xf32>
    %53 = arith.addf %51, %52 : vector<8x16xf32>
    %cst_26 = arith.constant 0.000000e+00 : f32
    %54 = vector.broadcast %cst_26 : f32 to vector<8x16xf32>
    %55 = arith.maximumf %53, %54 : vector<8x16xf32>
    %56 = arith.addf %50, %55 : vector<8x16xf32>
    %57 = vector.broadcast %21 : vector<8x1xf32> to vector<8x16xf32>
    %58 = arith.mulf %56, %57 : vector<8x16xf32>
    %59 = vector.broadcast %22 : vector<8x1xf32> to vector<8x16xf32>
    %60 = arith.addf %58, %59 : vector<8x16xf32>
    %cst_27 = arith.constant dense<0.000000e+00> : vector<8x16xf32>
    %61 = tpu.matmul %19, %60, %cst_27 {dimension_numbers = #tpu.dot_dimension_numbers<[1], [0], [0], [1], [0, 0, 1, 1], [], []>} : vector<8x8xf32>, vector<8x16xf32>, vector<8x16xf32> -> vector<8x16xf32>
    %62 = vector.broadcast %20 : vector<8x1xf32> to vector<8x16xf32>
    %63 = arith.addf %61, %62 : vector<8x16xf32>
    %cst_28 = arith.constant 0.000000e+00 : f32
    %64 = vector.broadcast %cst_28 : f32 to vector<8x16xf32>
    %65 = arith.maximumf %63, %64 : vector<8x16xf32>
    %66 = arith.addf %60, %65 : vector<8x16xf32>
    %67 = vector.broadcast %25 : vector<1x16xf32> to vector<8x16xf32>
    %68 = arith.mulf %66, %67 : vector<8x16xf32>
    %69 = vector.broadcast %26 : vector<1x16xf32> to vector<8x16xf32>
    %70 = arith.addf %68, %69 : vector<8x16xf32>
    %cst_29 = arith.constant dense<0.000000e+00> : vector<8x16xf32>
    %71 = tpu.matmul %70, %23, %cst_29 {dimension_numbers = #tpu.dot_dimension_numbers<[1], [0], [0], [1], [0, 0, 1, 1], [], []>} : vector<8x16xf32>, vector<16x16xf32>, vector<8x16xf32> -> vector<8x16xf32>
    %72 = vector.broadcast %24 : vector<1x16xf32> to vector<8x16xf32>
    %73 = arith.addf %71, %72 : vector<8x16xf32>
    %cst_30 = arith.constant 0.000000e+00 : f32
    %74 = vector.broadcast %cst_30 : f32 to vector<8x16xf32>
    %75 = arith.maximumf %73, %74 : vector<8x16xf32>
    %76 = arith.addf %70, %75 : vector<8x16xf32>
    %77 = vector.broadcast %25 : vector<1x16xf32> to vector<8x16xf32>
    %78 = arith.mulf %76, %77 : vector<8x16xf32>
    %79 = vector.broadcast %26 : vector<1x16xf32> to vector<8x16xf32>
    %80 = arith.addf %78, %79 : vector<8x16xf32>
    %cst_31 = arith.constant dense<0.000000e+00> : vector<8x16xf32>
    %81 = tpu.matmul %80, %23, %cst_31 {dimension_numbers = #tpu.dot_dimension_numbers<[1], [0], [0], [1], [0, 0, 1, 1], [], []>} : vector<8x16xf32>, vector<16x16xf32>, vector<8x16xf32> -> vector<8x16xf32>
    %82 = vector.broadcast %24 : vector<1x16xf32> to vector<8x16xf32>
    %83 = arith.addf %81, %82 : vector<8x16xf32>
    %cst_32 = arith.constant 0.000000e+00 : f32
    %84 = vector.broadcast %cst_32 : f32 to vector<8x16xf32>
    %85 = arith.maximumf %83, %84 : vector<8x16xf32>
    %86 = arith.addf %80, %85 : vector<8x16xf32>
    %c0_33 = arith.constant 0 : index
    %c0_34 = arith.constant 0 : index
    %87 = vector.load %arg9[%c0_33, %c0_34] : memref<16x8xf32, #tpu.memory_space<vmem>>, vector<16x8xf32>
    %cst_35 = arith.constant dense<0.000000e+00> : vector<8x8xf32>
    %88 = tpu.matmul %86, %87, %cst_35 {dimension_numbers = #tpu.dot_dimension_numbers<[1], [0], [0], [1], [0, 0, 1, 1], [], []>} : vector<8x16xf32>, vector<16x8xf32>, vector<8x8xf32> -> vector<8x8xf32>
    %c0_36 = arith.constant 0 : index
    %c0_37 = arith.constant 0 : index
    %89 = vector.load %arg10[%c0_36, %c0_37] : memref<1x8xf32, #tpu.memory_space<vmem>>, vector<1x8xf32>
    %90 = vector.broadcast %89 : vector<1x8xf32> to vector<8x8xf32>
    %91 = arith.addf %88, %90 : vector<8x8xf32>
    %92 = vector.broadcast %14 : vector<8x1xf32> to vector<8x8xf32>
    %93 = arith.mulf %91, %92 : vector<8x8xf32>
    %94 = vector.broadcast %4 : vector<8x1xf32> to vector<8x8xf32>
    %95 = arith.addf %93, %94 : vector<8x8xf32>
    %c0_38 = arith.constant 0 : index
    %c0_39 = arith.constant 0 : index
    %96 = vector.load %arg11[%c0_38, %c0_39] : memref<8x8xf32, #tpu.memory_space<vmem>>, vector<8x8xf32>
    tpu.vector_store %arg11[%c0_38, %c0_39], %95 {strides = array<i32>} : memref<8x8xf32, #tpu.memory_space<vmem>>, vector<8x8xf32>,
    return
  }
}

</mosaic_0001>

<llo_original>
// kernel: patchconv_forward.1
$region0: #{patchconv_forward.1}
  #allocation0 [shape = 'u32[]', space=smem, size = 0x4, offset = 0x4, fixed_abs, tag = 'smem constant byte address 0x4 - core index']
  #allocation1 [shape = 'u32[144,128]{1,0:T(1,128)}', space=vmem, size = 0x12000, scoped, tag = 'internal scratch']
  %s0 = inlined_call_operand.vmem [shape: f32[8,16], index: 0, kind: input, shape index: {}]
  %s1 = inlined_call_operand.vmem [shape: f32[8,8], index: 1, kind: input, shape index: {}]
  %s2 = inlined_call_operand.vmem [shape: f32[8,1], index: 2, kind: input, shape index: {}]
  %s3 = inlined_call_operand.vmem [shape: f32[8,1], index: 3, kind: input, shape index: {}]
  %s4 = inlined_call_operand.vmem [shape: f32[8,1], index: 4, kind: input, shape index: {}]
  %s5 = inlined_call_operand.vmem [shape: f32[16,16], index: 5, kind: input, shape index: {}]
  %s6 = inlined_call_operand.vmem [shape: f32[1,16], index: 6, kind: input, shape index: {}]
  %s7 = inlined_call_operand.vmem [shape: f32[1,16], index: 7, kind: input, shape index: {}]
  %s8 = inlined_call_operand.vmem [shape: f32[1,16], index: 8, kind: input, shape index: {}]
  %s9 = inlined_call_operand.vmem [shape: f32[16,8], index: 9, kind: input, shape index: {}]
  %s10 = inlined_call_operand.vmem [shape: f32[1,8], index: 10, kind: input, shape index: {}]
  %s11 = inlined_call_operand.hbm [shape: f32[8,8], index: 11, kind: output, shape index: {}]
  %s12 = sld [smem:[#allocation0]]
  $region54: #{patchconv_forward.1} parent=0
    _
  %s14 = ssub.s32 1, %s12
  %s15 = scalar_select 0, %s14, %s12
  $region1: #{patchconv_forward.1} parent=0
    #allocation2 [shape = 'u8[4096]{0}', space=vmem, size = 0x1000, scoped, tag = 'output window, operand 0, single buffered']
    #allocation3 [shape = 's32[1]{0}', space=sflag, size = 0x4, scoped, tag = 'scoped memory for patchconv_forward.1']
    %16 = vsyncpa [#allocation3], 0
    // Predicated region
    $region2: #{patchconv_forward.1} parent=1 // pred_check
      _
    $region3: #{patchconv_forward.1} parent=1 // pred_check_branch
      %18 = sbr.rel (0) target = $region5
    $region4: #{patchconv_forward.1} parent=1 // pred_region
      _
    $region5: #{patchconv_forward.1} parent=1 // pred_fallthru
      _
    // Predicated region
    $region6: #{patchconv_forward.1} parent=1 // pred_check
      _
    $region7: #{patchconv_forward.1} parent=1 // pred_check_branch
      %20 = sbr.rel (0) target = $region9
    $region8: #{patchconv_forward.1} parent=1 // pred_region
      _
    $region9: #{patchconv_forward.1} parent=1 // pred_fallthru
      _
    // Predicated region
    $region10: #{patchconv_forward.1} parent=1 // pred_check
      _
    $region11: #{patchconv_forward.1} parent=1 // pred_check_branch
      %22 = sbr.rel (0) target = $region13
    $region12: #{patchconv_forward.1} parent=1 // pred_region
      _
    $region13: #{patchconv_forward.1} parent=1 // pred_fallthru
      _
    // Predicated region
    $region14: #{patchconv_forward.1} parent=1 // pred_check
      _
    $region15: #{patchconv_forward.1} parent=1 // pred_check_branch
      %24 = sbr.rel (0) target = $region17
    $region16: #{patchconv_forward.1} parent=1 // pred_region
      _
    $region17: #{patchconv_forward.1} parent=1 // pred_fallthru
      _
    // Predicated region
    $region18: #{patchconv_forward.1} parent=1 // pred_check
      _
    $region19: #{patchconv_forward.1} parent=1 // pred_check_branch
      %26 = sbr.rel (0) target = $region21
    $region20: #{patchconv_forward.1} parent=1 // pred_region
      _
    $region21: #{patchconv_forward.1} parent=1 // pred_fallthru
      _
    // Predicated region
    $region22: #{patchconv_forward.1} parent=1 // pred_check
      _
    $region23: #{patchconv_forward.1} parent=1 // pred_check_branch
      %28 = sbr.rel (0) target = $region25
    $region24: #{patchconv_forward.1} parent=1 // pred_region
      _
    $region25: #{patchconv_forward.1} parent=1 // pred_fallthru
      _
    // Predicated region
    $region26: #{patchconv_forward.1} parent=1 // pred_check
      _
    $region27: #{patchconv_forward.1} parent=1 // pred_check_branch
      %30 = sbr.rel (0) target = $region29
    $region28: #{patchconv_forward.1} parent=1 // pred_region
      _
    $region29: #{patchconv_forward.1} parent=1 // pred_fallthru
      _
    // Predicated region
    $region30: #{patchconv_forward.1} parent=1 // pred_check
      _
    $region31: #{patchconv_forward.1} parent=1 // pred_check_branch
      %32 = sbr.rel (0) target = $region33
    $region32: #{patchconv_forward.1} parent=1 // pred_region
      _
    $region33: #{patchconv_forward.1} parent=1 // pred_fallthru
      _
    // Predicated region
    $region34: #{patchconv_forward.1} parent=1 // pred_check
      _
    $region35: #{patchconv_forward.1} parent=1 // pred_check_branch
      %34 = sbr.rel (0) target = $region37
    $region36: #{patchconv_forward.1} parent=1 // pred_region
      _
    $region37: #{patchconv_forward.1} parent=1 // pred_fallthru
      _
    // Predicated region
    $region38: #{patchconv_forward.1} parent=1 // pred_check
      _
    $region39: #{patchconv_forward.1} parent=1 // pred_check_branch
      %36 = sbr.rel (0) target = $region41
    $region40: #{patchconv_forward.1} parent=1 // pred_region
      _
    $region41: #{patchconv_forward.1} parent=1 // pred_fallthru
      _
    // Predicated region
    $region42: #{patchconv_forward.1} parent=1 // pred_check
      _
    $region43: #{patchconv_forward.1} parent=1 // pred_check_branch
      %38 = sbr.rel (0) target = $region45
    $region44: #{patchconv_forward.1} parent=1 // pred_region
      _
    $region45: #{patchconv_forward.1} parent=1 // pred_fallthru
      _
    %v39 = vld [vmem:[%s0] sm:$0xff]
    %vm40 = vcmask 130048
    %v41 = vsel %vm40, %v39, 0.0
    %42 = vadd.xlane.f32.xlu0 %v41
    %v43 = vpop.xlane.xlu0 %42
    %v44 = vrcp.pop 16.0
    %v45 = vmul.f32 %v43, %v44
    %v46 = vsub.f32 %v39, %v45
    %v47 = vmul.f32 %v46, %v46
    %v48 = vsel %vm40, %v47, 0.0
    %49 = vadd.xlane.f32.xlu0 %v48
    %v50 = vpop.xlane.xlu0 %49
    %v51 = vmul.f32 %v50, %v44
    %v52 = vadd.f32 %v51, 1e-05
    %v53 = vrsqrt.pop %v52
    %v54 = vmul.f32 %v52, %v53
    %vm55 = vcmp.eq.f32.partialorder %v52, inf
    %v56 = vsel %vm55, %v52, %v54
    %vm57 = vcmp.eq.f32.partialorder %v52, 0.0
    %v58 = vand.u32 %v52, 2147483648
    %v59 = vsel %vm57, %v58, %v56
    %v60 = vrcp.pop %v59
    %v61 = vmul.f32 %v46, %v60
    %v62 = vld [vmem:[%s1] sm:$0xff]
    %v63 = vld [vmem:[%s2] sm:$0xff]
    %v64 = vld [vmem:[%s3] sm:$0xff]
    %v65 = vld [vmem:[%s4] sm:$0xff]
    %v66 = vld [vmem:[%s5] sm:$0xff]
    %v67 = vld [vmem:[%s5 + $0x8] sm:$0xff]
    %v68 = vld [vmem:[%s6] sm:$0x1]
    %v69 = vld [vmem:[%s7] sm:$0x1]
    %v70 = vld [vmem:[%s8] sm:$0x1]
    %72 = vset.pattern.permute.xlu0 0
    %73 = vperm.xlu0 %72, %v64
    %v74 = vpop.permute.xlu0 %73
    %v76 = vmul.f32 %v61, %v74
    %78 = vset.pattern.permute.xlu0 0
    %79 = vperm.xlu0 %78, %v65
    %v80 = vpop.permute.xlu0 %79
    %v82 = vadd.f32 %v76, %v80
    %84 = vset.pattern.permute.xlu0 0
    %85 = vperm.xlu0 %84, %v63
    %v86 = vpop.permute.xlu0 %85
    %vm88 = vcmask 64512
    %v90 = vsel %vm88, %v62, 0
    %92 = vmatprep.subr.mxu0 0.0
    %93 = vmatpush1.msra.mxu0 %v82
    %94 = vmatprep.subr.mxu0 0.0
    %95 = vmatpush1.msra.mxu0 0.0
    %96 = vmatprep.subr.mxu0 0.0
    %97 = vmatpush1.msra.mxu0 0.0
    %98 = vmatprep.subr.mxu0 0.0
    %99 = vmatpush1.msra.mxu0 0.0
    %100 = vmatprep.subr.mxu0 0.0
    %101 = vmatpush1.msra.mxu0 0.0
    %102 = vmatprep.subr.mxu0 0.0
    %103 = vmatpush1.msra.mxu0 0.0
    %104 = vmatprep.subr.mxu0 0.0
    %105 = vmatpush1.msra.mxu0 0.0
    %106 = vmatprep.subr.mxu0 0.0
    %107 = vmatpush1.msra.mxu0 0.0
    %108 = vmatprep.subr.mxu0 0.0
    %109 = vmatpush1.msra.mxu0 0.0
    %110 = vmatprep.subr.mxu0 0.0
    %111 = vmatpush1.msra.mxu0 0.0
    %112 = vmatprep.subr.mxu0 0.0
    %113 = vmatpush1.msra.mxu0 0.0
    %114 = vmatprep.subr.mxu0 0.0
    %115 = vmatpush1.msra.mxu0 0.0
    %116 = vmatprep.subr.mxu0 0.0
    %117 = vmatpush1.msra.mxu0 0.0
    %118 = vmatprep.subr.mxu0 0.0
    %119 = vmatpush1.msra.mxu0 0.0
    %120 = vmatprep.subr.mxu0 0.0
    %121 = vmatpush1.msra.mxu0 0.0
    %122 = vmatprep.subr.mxu0 0.0
    %123 = vmatpush1.msra.mxu0 0.0
    %124 = vmatprep.subr.mxu0 0.0
    %125 = vmatpush1.msra.mxu0 0.0
    %126 = vmatprep.subr.mxu0 0.0
    %127 = vmatpush1.msra.mxu0 0.0
    %128 = vmatprep.subr.mxu0 0.0
    %129 = vmatpush1.msra.mxu0 0.0
    %130 = vmatprep.subr.mxu0 0.0
    %131 = vmatpush1.msra.mxu0 0.0
    %132 = vmatprep.subr.mxu0 0.0
    %133 = vmatpush1.msra.mxu0 0.0
    %134 = vmatprep.subr.mxu0 0.0
    %135 = vmatpush1.msra.mxu0 0.0
    %136 = vmatprep.subr.mxu0 0.0
    %137 = vmatpush1.msra.mxu0 0.0
    %138 = vmatprep.subr.mxu0 0.0
    %139 = vmatpush1.msra.mxu0 0.0
    %140 = vmatprep.subr.mxu0 0.0
    %141 = vmatpush1.msra.mxu0 0.0
    %142 = vmatprep.subr.mxu0 0.0
    %143 = vmatpush1.msra.mxu0 0.0
    %144 = vmatprep.subr.mxu0 0.0
    %145 = vmatpush1.msra.mxu0 0.0
    %146 = vmatprep.subr.mxu0 0.0
    %147 = vmatpush1.msra.mxu0 0.0
    %148 = vmatprep.subr.mxu0 0.0
    %149 = vmatpush1.msra.mxu0 0.0
    %150 = vmatprep.subr.mxu0 0.0
    %151 = vmatpush1.msra.mxu0 0.0
    %152 = vmatprep.subr.mxu0 0.0
    %153 = vmatpush1.msra.mxu0 0.0
    %154 = vmatprep.subr.mxu0 0.0
    %155 = vmatpush1.msra.mxu0 0.0
    %156 = vmatprep.mubr.f32.mxu0 0.0
    %157 = vmatmul.mubr.f32.gmra.mrb[0].mxu0 %v90
    %v158 = vpop.f32.mrb[0].mxu0
    %v159 = vadd.f32 %v86, %v158
    %v160 = vpop.f32.mrb[0].mxu0
    %161 = vdwg.mxu0
    %v162 = vmax.f32 %v159, 0.0
    %v163 = vadd.f32 %v82, %v162
    %v165 = vlaneseq
    %v166 = vshrl.u32 %v165, 7
    %v167 = vsub.s32 0, %v166
    %v168 = vrot.slane %v69, %v167
    %v170 = vmul.f32 %v163, %v168
    %v172 = vlaneseq
    %v173 = vshrl.u32 %v172, 7
    %v174 = vsub.s32 0, %v173
    %v175 = vrot.slane %v70, %v174
    %v177 = vadd.f32 %v170, %v175
    %v179 = vlaneseq
    %v180 = vshrl.u32 %v179, 7
    %v181 = vsub.s32 0, %v180
    %v182 = vrot.slane %v68, %v181
    %v185 = vsel %vm40, %v177, 0
    %187 = vmatprep.subr.mxu0 0.0
    %188 = vmatpush1.msra.mxu0 %v66
    %189 = vmatprep.subr.mxu0 0.0
    %190 = vmatpush1.msra.mxu0 %v67
    %191 = vmatprep.subr.mxu0 0.0
    %192 = vmatpush1.msra.mxu0 0.0
    %193 = vmatprep.subr.mxu0 0.0
    %194 = vmatpush1.msra.mxu0 0.0
    %195 = vmatprep.subr.mxu0 0.0
    %196 = vmatpush1.msra.mxu0 0.0
    %197 = vmatprep.subr.mxu0 0.0
    %198 = vmatpush1.msra.mxu0 0.0
    %199 = vmatprep.subr.mxu0 0.0
    %200 = vmatpush1.msra.mxu0 0.0
    %201 = vmatprep.subr.mxu0 0.0
    %202 = vmatpush1.msra.mxu0 0.0
    %203 = vmatprep.subr.mxu0 0.0
    %204 = vmatpush1.msra.mxu0 0.0
    %205 = vmatprep.subr.mxu0 0.0
    %206 = vmatpush1.msra.mxu0 0.0
    %207 = vmatprep.subr.mxu0 0.0
    %208 = vmatpush1.msra.mxu0 0.0
    %209 = vmatprep.subr.mxu0 0.0
    %210 = vmatpush1.msra.mxu0 0.0
    %211 = vmatprep.subr.mxu0 0.0
    %212 = vmatpush1.msra.mxu0 0.0
    %213 = vmatprep.subr.mxu0 0.0
    %214 = vmatpush1.msra.mxu0 0.0
    %215 = vmatprep.subr.mxu0 0.0
    %216 = vmatpush1.msra.mxu0 0.0
    %217 = vmatprep.subr.mxu0 0.0
    %218 = vmatpush1.msra.mxu0 0.0
    %219 = vmatprep.subr.mxu0 0.0
    %220 = vmatpush1.msra.mxu0 0.0
    %221 = vmatprep.subr.mxu0 0.0
    %222 = vmatpush1.msra.mxu0 0.0
    %223 = vmatprep.subr.mxu0 0.0
    %224 = vmatpush1.msra.mxu0 0.0
    %225 = vmatprep.subr.mxu0 0.0
    %226 = vmatpush1.msra.mxu0 0.0
    %227 = vmatprep.subr.mxu0 0.0
    %228 = vmatpush1.msra.mxu0 0.0
    %229 = vmatprep.subr.mxu0 0.0
    %230 = vmatpush1.msra.mxu0 0.0
    %231 = vmatprep.subr.mxu0 0.0
    %232 = vmatpush1.msra.mxu0 0.0
    %233 = vmatprep.subr.mxu0 0.0
    %234 = vmatpush1.msra.mxu0 0.0
    %235 = vmatprep.subr.mxu0 0.0
    %236 = vmatpush1.msra.mxu0 0.0
    %237 = vmatprep.subr.mxu0 0.0
    %238 = vmatpush1.msra.mxu0 0.0
    %239 = vmatprep.subr.mxu0 0.0
    %240 = vmatpush1.msra.mxu0 0.0
    %241 = vmatprep.subr.mxu0 0.0
    %242 = vmatpush1.msra.mxu0 0.0
    %243 = vmatprep.subr.mxu0 0.0
    %244 = vmatpush1.msra.mxu0 0.0
    %245 = vmatprep.subr.mxu0 0.0
    %246 = vmatpush1.msra.mxu0 0.0
    %247 = vmatprep.subr.mxu0 0.0
    %248 = vmatpush1.msra.mxu0 0.0
    %249 = vmatprep.subr.mxu0 0.0
    %250 = vmatpush1.msra.mxu0 0.0
    %251 = vmatprep.mubr.f32.mxu0 0.0
    %252 = vmatmul.mubr.f32.gmra.mrb[0].mxu0 %v185
    %v253 = vpop.f32.mrb[0].mxu0
    %v254 = vadd.f32 %v182, %v253
    %v255 = vpop.f32.mrb[0].mxu0
    %256 = vdwg.mxu0
    %v257 = vmax.f32 %v254, 0.0
    %v258 = vadd.f32 %v177, %v257
    %v259 = vmul.f32 %v258, %v168
    %v260 = vadd.f32 %v259, %v175
    %v262 = vsel %vm40, %v260, 0
    %264 = vmatprep.subr.mxu0 0.0
    %265 = vmatpush1.msra.mxu0 %v66
    %266 = vmatprep.subr.mxu0 0.0
    %267 = vmatpush1.msra.mxu0 %v67
    %268 = vmatprep.subr.mxu0 0.0
    %269 = vmatpush1.msra.mxu0 0.0
    %270 = vmatprep.subr.mxu0 0.0
    %271 = vmatpush1.msra.mxu0 0.0
    %272 = vmatprep.subr.mxu0 0.0
    %273 = vmatpush1.msra.mxu0 0.0
    %274 = vmatprep.subr.mxu0 0.0
    %275 = vmatpush1.msra.mxu0 0.0
    %276 = vmatprep.subr.mxu0 0.0
    %277 = vmatpush1.msra.mxu0 0.0
    %278 = vmatprep.subr.mxu0 0.0
    %279 = vmatpush1.msra.mxu0 0.0
    %280 = vmatprep.subr.mxu0 0.0
    %281 = vmatpush1.msra.mxu0 0.0
    %282 = vmatprep.subr.mxu0 0.0
    %283 = vmatpush1.msra.mxu0 0.0
    %284 = vmatprep.subr.mxu0 0.0
    %285 = vmatpush1.msra.mxu0 0.0
    %286 = vmatprep.subr.mxu0 0.0
    %287 = vmatpush1.msra.mxu0 0.0
    %288 = vmatprep.subr.mxu0 0.0
    %289 = vmatpush1.msra.mxu0 0.0
    %290 = vmatprep.subr.mxu0 0.0
    %291 = vmatpush1.msra.mxu0 0.0
    %292 = vmatprep.subr.mxu0 0.0
    %293 = vmatpush1.msra.mxu0 0.0
    %294 = vmatprep.subr.mxu0 0.0
    %295 = vmatpush1.msra.mxu0 0.0
    %296 = vmatprep.subr.mxu0 0.0
    %297 = vmatpush1.msra.mxu0 0.0
    %298 = vmatprep.subr.mxu0 0.0
    %299 = vmatpush1.msra.mxu0 0.0
    %300 = vmatprep.subr.mxu0 0.0
    %301 = vmatpush1.msra.mxu0 0.0
    %302 = vmatprep.subr.mxu0 0.0
    %303 = vmatpush1.msra.mxu0 0.0
    %304 = vmatprep.subr.mxu0 0.0
    %305 = vmatpush1.msra.mxu0 0.0
    %306 = vmatprep.subr.mxu0 0.0
    %307 = vmatpush1.msra.mxu0 0.0
    %308 = vmatprep.subr.mxu0 0.0
    %309 = vmatpush1.msra.mxu0 0.0
    %310 = vmatprep.subr.mxu0 0.0
    %311 = vmatpush1.msra.mxu0 0.0
    %312 = vmatprep.subr.mxu0 0.0
    %313 = vmatpush1.msra.mxu0 0.0
    %314 = vmatprep.subr.mxu0 0.0
    %315 = vmatpush1.msra.mxu0 0.0
    %316 = vmatprep.subr.mxu0 0.0
    %317 = vmatpush1.msra.mxu0 0.0
    %318 = vmatprep.subr.mxu0 0.0
    %319 = vmatpush1.msra.mxu0 0.0
    %320 = vmatprep.subr.mxu0 0.0
    %321 = vmatpush1.msra.mxu0 0.0
    %322 = vmatprep.subr.mxu0 0.0
    %323 = vmatpush1.msra.mxu0 0.0
    %324 = vmatprep.subr.mxu0 0.0
    %325 = vmatpush1.msra.mxu0 0.0
    %326 = vmatprep.subr.mxu0 0.0
    %327 = vmatpush1.msra.mxu0 0.0
    %328 = vmatprep.mubr.f32.mxu0 0.0
    %329 = vmatmul.mubr.f32.gmra.mrb[0].mxu0 %v262
    %v330 = vpop.f32.mrb[0].mxu0
    %v331 = vadd.f32 %v182, %v330
    %v332 = vpop.f32.mrb[0].mxu0
    %333 = vdwg.mxu0
    %v334 = vmax.f32 %v331, 0.0
    %v335 = vadd.f32 %v260, %v334
    %v336 = vmul.f32 %v335, %v74
    %v337 = vadd.f32 %v336, %v80
    %338 = vmatprep.subr.mxu0 0.0
    %339 = vmatpush1.msra.mxu0 %v337
    %340 = vmatprep.subr.mxu0 0.0
    %341 = vmatpush1.msra.mxu0 0.0
    %342 = vmatprep.subr.mxu0 0.0
    %343 = vmatpush1.msra.mxu0 0.0
    %344 = vmatprep.subr.mxu0 0.0
    %345 = vmatpush1.msra.mxu0 0.0
    %346 = vmatprep.subr.mxu0 0.0
    %347 = vmatpush1.msra.mxu0 0.0
    %348 = vmatprep.subr.mxu0 0.0
    %349 = vmatpush1.msra.mxu0 0.0
    %350 = vmatprep.subr.mxu0 0.0
    %351 = vmatpush1.msra.mxu0 0.0
    %352 = vmatprep.subr.mxu0 0.0
    %353 = vmatpush1.msra.mxu0 0.0
    %354 = vmatprep.subr.mxu0 0.0
    %355 = vmatpush1.msra.mxu0 0.0
    %356 = vmatprep.subr.mxu0 0.0
    %357 = vmatpush1.msra.mxu0 0.0
    %358 = vmatprep.subr.mxu0 0.0
    %359 = vmatpush1.msra.mxu0 0.0
    %360 = vmatprep.subr.mxu0 0.0
    %361 = vmatpush1.msra.mxu0 0.0
    %362 = vmatprep.subr.mxu0 0.0
    %363 = vmatpush1.msra.mxu0 0.0
    %364 = vmatprep.subr.mxu0 0.0
    %365 = vmatpush1.msra.mxu0 0.0
    %366 = vmatprep.subr.mxu0 0.0
    %367 = vmatpush1.msra.mxu0 0.0
    %368 = vmatprep.subr.mxu0 0.0
    %369 = vmatpush1.msra.mxu0 0.0
    %370 = vmatprep.subr.mxu0 0.0
    %371 = vmatpush1.msra.mxu0 0.0
    %372 = vmatprep.subr.mxu0 0.0
    %373 = vmatpush1.msra.mxu0 0.0
    %374 = vmatprep.subr.mxu0 0.0
    %375 = vmatpush1.msra.mxu0 0.0
    %376 = vmatprep.subr.mxu0 0.0
    %377 = vmatpush1.msra.mxu0 0.0
    %378 = vmatprep.subr.mxu0 0.0
    %379 = vmatpush1.msra.mxu0 0.0
    %380 = vmatprep.subr.mxu0 0.0
    %381 = vmatpush1.msra.mxu0 0.0
    %382 = vmatprep.subr.mxu0 0.0
    %383 = vmatpush1.msra.mxu0 0.0
    %384 = vmatprep.subr.mxu0 0.0
    %385 = vmatpush1.msra.mxu0 0.0
    %386 = vmatprep.subr.mxu0 0.0
    %387 = vmatpush1.msra.mxu0 0.0
    %388 = vmatprep.subr.mxu0 0.0
    %389 = vmatpush1.msra.mxu0 0.0
    %390 = vmatprep.subr.mxu0 0.0
    %391 = vmatpush1.msra.mxu0 0.0
    %392 = vmatprep.subr.mxu0 0.0
    %393 = vmatpush1.msra.mxu0 0.0
    %394 = vmatprep.subr.mxu0 0.0
    %395 = vmatpush1.msra.mxu0 0.0
    %396 = vmatprep.subr.mxu0 0.0
    %397 = vmatpush1.msra.mxu0 0.0
    %398 = vmatprep.subr.mxu0 0.0
    %399 = vmatpush1.msra.mxu0 0.0
    %400 = vmatprep.subr.mxu0 0.0
    %401 = vmatpush1.msra.mxu0 0.0
    %402 = vmatprep.mubr.f32.mxu0 0.0
    %403 = vmatmul.mubr.f32.gmra.mrb[0].mxu0 %v90
    %v404 = vpop.f32.mrb[0].mxu0
    %v405 = vadd.f32 %v86, %v404
    %v406 = vpop.f32.mrb[0].mxu0
    %407 = vdwg.mxu0
    %v408 = vmax.f32 %v405, 0.0
    %v409 = vadd.f32 %v337, %v408
    %v410 = vmul.f32 %v409, %v168
    %v411 = vadd.f32 %v410, %v175
    %v413 = vsel %vm40, %v411, 0
    %415 = vmatprep.subr.mxu0 0.0
    %416 = vmatpush1.msra.mxu0 %v66
    %417 = vmatprep.subr.mxu0 0.0
    %418 = vmatpush1.msra.mxu0 %v67
    %419 = vmatprep.subr.mxu0 0.0
    %420 = vmatpush1.msra.mxu0 0.0
    %421 = vmatprep.subr.mxu0 0.0
    %422 = vmatpush1.msra.mxu0 0.0
    %423 = vmatprep.subr.mxu0 0.0
    %424 = vmatpush1.msra.mxu0 0.0
    %425 = vmatprep.subr.mxu0 0.0
    %426 = vmatpush1.msra.mxu0 0.0
    %427 = vmatprep.subr.mxu0 0.0
    %428 = vmatpush1.msra.mxu0 0.0
    %429 = vmatprep.subr.mxu0 0.0
    %430 = vmatpush1.msra.mxu0 0.0
    %431 = vmatprep.subr.mxu0 0.0
    %432 = vmatpush1.msra.mxu0 0.0
    %433 = vmatprep.subr.mxu0 0.0
    %434 = vmatpush1.msra.mxu0 0.0
    %435 = vmatprep.subr.mxu0 0.0
    %436 = vmatpush1.msra.mxu0 0.0
    %437 = vmatprep.subr.mxu0 0.0
    %438 = vmatpush1.msra.mxu0 0.0
    %439 = vmatprep.subr.mxu0 0.0
    %440 = vmatpush1.msra.mxu0 0.0
    %441 = vmatprep.subr.mxu0 0.0
    %442 = vmatpush1.msra.mxu0 0.0
    %443 = vmatprep.subr.mxu0 0.0
    %444 = vmatpush1.msra.mxu0 0.0
    %445 = vmatprep.subr.mxu0 0.0
    %446 = vmatpush1.msra.mxu0 0.0
    %447 = vmatprep.subr.mxu0 0.0
    %448 = vmatpush1.msra.mxu0 0.0
    %449 = vmatprep.subr.mxu0 0.0
    %450 = vmatpush1.msra.mxu0 0.0
    %451 = vmatprep.subr.mxu0 0.0
    %452 = vmatpush1.msra.mxu0 0.0
    %453 = vmatprep.subr.mxu0 0.0
    %454 = vmatpush1.msra.mxu0 0.0
    %455 = vmatprep.subr.mxu0 0.0
    %456 = vmatpush1.msra.mxu0 0.0
    %457 = vmatprep.subr.mxu0 0.0
    %458 = vmatpush1.msra.mxu0 0.0
    %459 = vmatprep.subr.mxu0 0.0
    %460 = vmatpush1.msra.mxu0 0.0
    %461 = vmatprep.subr.mxu0 0.0
    %462 = vmatpush1.msra.mxu0 0.0
    %463 = vmatprep.subr.mxu0 0.0
    %464 = vmatpush1.msra.mxu0 0.0
    %465 = vmatprep.subr.mxu0 0.0
    %466 = vmatpush1.msra.mxu0 0.0
    %467 = vmatprep.subr.mxu0 0.0
    %468 = vmatpush1.msra.mxu0 0.0
    %469 = vmatprep.subr.mxu0 0.0
    %470 = vmatpush1.msra.mxu0 0.0
    %471 = vmatprep.subr.mxu0 0.0
    %472 = vmatpush1.msra.mxu0 0.0
    %473 = vmatprep.subr.mxu0 0.0
    %474 = vmatpush1.msra.mxu0 0.0
    %475 = vmatprep.subr.mxu0 0.0
    %476 = vmatpush1.msra.mxu0 0.0
    %477 = vmatprep.subr.mxu0 0.0
    %478 = vmatpush1.msra.mxu0 0.0
    %479 = vmatprep.mubr.f32.mxu0 0.0
    %480 = vmatmul.mubr.f32.gmra.mrb[0].mxu0 %v413
    %v481 = vpop.f32.mrb[0].mxu0
    %v482 = vadd.f32 %v182, %v481
    %v483 = vpop.f32.mrb[0].mxu0
    %484 = vdwg.mxu0
    %v485 = vmax.f32 %v482, 0.0
    %v486 = vadd.f32 %v411, %v485
    %v487 = vmul.f32 %v486, %v168
    %v488 = vadd.f32 %v487, %v175
    %v490 = vsel %vm40, %v488, 0
    %492 = vmatprep.subr.mxu0 0.0
    %493 = vmatpush1.msra.mxu0 %v66
    %494 = vmatprep.subr.mxu0 0.0
    %495 = vmatpush1.msra.mxu0 %v67
    %496 = vmatprep.subr.mxu0 0.0
    %497 = vmatpush1.msra.mxu0 0.0
    %498 = vmatprep.subr.mxu0 0.0
    %499 = vmatpush1.msra.mxu0 0.0
    %500 = vmatprep.subr.mxu0 0.0
    %501 = vmatpush1.msra.mxu0 0.0
    %502 = vmatprep.subr.mxu0 0.0
    %503 = vmatpush1.msra.mxu0 0.0
    %504 = vmatprep.subr.mxu0 0.0
    %505 = vmatpush1.msra.mxu0 0.0
    %506 = vmatprep.subr.mxu0 0.0
    %507 = vmatpush1.msra.mxu0 0.0
    %508 = vmatprep.subr.mxu0 0.0
    %509 = vmatpush1.msra.mxu0 0.0
    %510 = vmatprep.subr.mxu0 0.0
    %511 = vmatpush1.msra.mxu0 0.0
    %512 = vmatprep.subr.mxu0 0.0
    %513 = vmatpush1.msra.mxu0 0.0
    %514 = vmatprep.subr.mxu0 0.0
    %515 = vmatpush1.msra.mxu0 0.0
    %516 = vmatprep.subr.mxu0 0.0
    %517 = vmatpush1.msra.mxu0 0.0
    %518 = vmatprep.subr.mxu0 0.0
    %519 = vmatpush1.msra.mxu0 0.0
    %520 = vmatprep.subr.mxu0 0.0
    %521 = vmatpush1.msra.mxu0 0.0
    %522 = vmatprep.subr.mxu0 0.0
    %523 = vmatpush1.msra.mxu0 0.0
    %524 = vmatprep.subr.mxu0 0.0
    %525 = vmatpush1.msra.mxu0 0.0
    %526 = vmatprep.subr.mxu0 0.0
    %527 = vmatpush1.msra.mxu0 0.0
    %528 = vmatprep.subr.mxu0 0.0
    %529 = vmatpush1.msra.mxu0 0.0
    %530 = vmatprep.subr.mxu0 0.0
    %531 = vmatpush1.msra.mxu0 0.0
    %532 = vmatprep.subr.mxu0 0.0
    %533 = vmatpush1.msra.mxu0 0.0
    %534 = vmatprep.subr.mxu0 0.0
    %535 = vmatpush1.msra.mxu0 0.0
    %536 = vmatprep.subr.mxu0 0.0
    %537 = vmatpush1.msra.mxu0 0.0
    %538 = vmatprep.subr.mxu0 0.0
    %539 = vmatpush1.msra.mxu0 0.0
    %540 = vmatprep.subr.mxu0 0.0
    %541 = vmatpush1.msra.mxu0 0.0
    %542 = vmatprep.subr.mxu0 0.0
    %543 = vmatpush1.msra.mxu0 0.0
    %544 = vmatprep.subr.mxu0 0.0
    %545 = vmatpush1.msra.mxu0 0.0
    %546 = vmatprep.subr.mxu0 0.0
    %547 = vmatpush1.msra.mxu0 0.0
    %548 = vmatprep.subr.mxu0 0.0
    %549 = vmatpush1.msra.mxu0 0.0
    %550 = vmatprep.subr.mxu0 0.0
    %551 = vmatpush1.msra.mxu0 0.0
    %552 = vmatprep.subr.mxu0 0.0
    %553 = vmatpush1.msra.mxu0 0.0
    %554 = vmatprep.subr.mxu0 0.0
    %555 = vmatpush1.msra.mxu0 0.0
    %556 = vmatprep.mubr.f32.mxu0 0.0
    %557 = vmatmul.mubr.f32.gmra.mrb[0].mxu0 %v490
    %v558 = vpop.f32.mrb[0].mxu0
    %v559 = vadd.f32 %v182, %v558
    %v560 = vpop.f32.mrb[0].mxu0
    %561 = vdwg.mxu0
    %v562 = vmax.f32 %v559, 0.0
    %v563 = vadd.f32 %v488, %v562
    %v564 = vld [vmem:[%s9] sm:$0xff]
    %v565 = vld [vmem:[%s9 + $0x8] sm:$0xff]
    %v566 = vld [vmem:[%s10] sm:$0x1]
    %v568 = vlaneseq
    %v569 = vshrl.u32 %v568, 7
    %v570 = vsub.s32 0, %v569
    %v571 = vrot.slane %v566, %v570
    %v574 = vsel %vm40, %v563, 0
    %576 = vmatprep.subr.mxu0 0.0
    %577 = vmatpush1.msra.mxu0 %v564
    %578 = vmatprep.subr.mxu0 0.0
    %579 = vmatpush1.msra.mxu0 %v565
    %580 = vmatprep.subr.mxu0 0.0
    %581 = vmatpush1.msra.mxu0 0.0
    %582 = vmatprep.subr.mxu0 0.0
    %583 = vmatpush1.msra.mxu0 0.0
    %584 = vmatprep.subr.mxu0 0.0
    %585 = vmatpush1.msra.mxu0 0.0
    %586 = vmatprep.subr.mxu0 0.0
    %587 = vmatpush1.msra.mxu0 0.0
    %588 = vmatprep.subr.mxu0 0.0
    %589 = vmatpush1.msra.mxu0 0.0
    %590 = vmatprep.subr.mxu0 0.0
    %591 = vmatpush1.msra.mxu0 0.0
    %592 = vmatprep.subr.mxu0 0.0
    %593 = vmatpush1.msra.mxu0 0.0
    %594 = vmatprep.subr.mxu0 0.0
    %595 = vmatpush1.msra.mxu0 0.0
    %596 = vmatprep.subr.mxu0 0.0
    %597 = vmatpush1.msra.mxu0 0.0
    %598 = vmatprep.subr.mxu0 0.0
    %599 = vmatpush1.msra.mxu0 0.0
    %600 = vmatprep.subr.mxu0 0.0
    %601 = vmatpush1.msra.mxu0 0.0
    %602 = vmatprep.subr.mxu0 0.0
    %603 = vmatpush1.msra.mxu0 0.0
    %604 = vmatprep.subr.mxu0 0.0
    %605 = vmatpush1.msra.mxu0 0.0
    %606 = vmatprep.subr.mxu0 0.0
    %607 = vmatpush1.msra.mxu0 0.0
    %608 = vmatprep.subr.mxu0 0.0
    %609 = vmatpush1.msra.mxu0 0.0
    %610 = vmatprep.subr.mxu0 0.0
    %611 = vmatpush1.msra.mxu0 0.0
    %612 = vmatprep.subr.mxu0 0.0
    %613 = vmatpush1.msra.mxu0 0.0
    %614 = vmatprep.subr.mxu0 0.0
    %615 = vmatpush1.msra.mxu0 0.0
    %616 = vmatprep.subr.mxu0 0.0
    %617 = vmatpush1.msra.mxu0 0.0
    %618 = vmatprep.subr.mxu0 0.0
    %619 = vmatpush1.msra.mxu0 0.0
    %620 = vmatprep.subr.mxu0 0.0
    %621 = vmatpush1.msra.mxu0 0.0
    %622 = vmatprep.subr.mxu0 0.0
    %623 = vmatpush1.msra.mxu0 0.0
    %624 = vmatprep.subr.mxu0 0.0
    %625 = vmatpush1.msra.mxu0 0.0
    %626 = vmatprep.subr.mxu0 0.0
    %627 = vmatpush1.msra.mxu0 0.0
    %628 = vmatprep.subr.mxu0 0.0
    %629 = vmatpush1.msra.mxu0 0.0
    %630 = vmatprep.subr.mxu0 0.0
    %631 = vmatpush1.msra.mxu0 0.0
    %632 = vmatprep.subr.mxu0 0.0
    %633 = vmatpush1.msra.mxu0 0.0
    %634 = vmatprep.subr.mxu0 0.0
    %635 = vmatpush1.msra.mxu0 0.0
    %636 = vmatprep.subr.mxu0 0.0
    %637 = vmatpush1.msra.mxu0 0.0
    %638 = vmatprep.subr.mxu0 0.0
    %639 = vmatpush1.msra.mxu0 0.0
    %640 = vmatprep.mubr.f32.mxu0 0.0
    %641 = vmatmul.mubr.f32.gmra.mrb[0].mxu0 %v574
    %v642 = vpop.f32.mrb[0].mxu0
    %v643 = vadd.f32 %v571, %v642
    %v644 = vpop.f32.mrb[0].mxu0
    %645 = vdwg.mxu0
    %v646 = vmul.f32 %v643, %v59
    %v647 = vadd.f32 %v646, %v45
    %648 = vst.msk [vmem:[#allocation2] sm:$0xff] %vm88, %v647
    // Predicated region
    $region46: #{patchconv_forward.1} parent=1 // pred_check
      _
    $region47: #{patchconv_forward.1} parent=1 // pred_check_branch
      %650 = sbr.rel (0) target = $region49
    $region48: #{patchconv_forward.1} parent=1 // pred_region
      %s652 = ssub.s32 128, 128
      %653 = vsyncadd [#allocation3], %s652
      %s655 = sshll.u32 [#allocation2], 4
      %s656 = int_to_ptr.vmem [resolvable:$true] %s655
      %658 = dma.vmem_to_hbm [thread:$0]  %s656, 128, %s11, [#allocation3]
    $region49: #{patchconv_forward.1} parent=1 // pred_fallthru
      _
    // Predicated region
    $region50: #{patchconv_forward.1} parent=1 // pred_check
      _
    $region51: #{patchconv_forward.1} parent=1 // pred_check_branch
      %660 = sbr.rel (0) target = $region53
    $region52: #{patchconv_forward.1} parent=1 // pred_region
      %661 = dma.done [#allocation3], 128
    $region53: #{patchconv_forward.1} parent=1 // pred_fallthru
      _
    %662 = vsyncpa [#allocation3], 1

</llo_original>
